<compile_context>
chip_gen: v5e
topology: v5e:2x2
jax: 0.10.0
libtpu: 0.0.40
codegen_flags: <defaults>
</compile_context>

<pallas_src>
import functools

import jax
import jax.numpy as jnp
from jax.experimental import pallas as pl
from jax.experimental.pallas import tpu as pltpu


def _downsample_kernel(x_ref, w_ref, b_ref, o_ref, p_ref, *, tho, Wo, C):
    """One (batch, row-tile) step of the stride-2 3x3 conv.

    x_ref: (Ho+1, 2, Wo+1, 2C)  padded image, rows/cols pre-paired:  [a, s, j, u*C+c]
                                 == padded_NHWC[2a+s, 2j+u, c]       (bf16)
    w_ref: (C, 9C)              weights, cols ordered (kh*3 + kw)*C + ci   (bf16)
    b_ref: (C, 1)               bias (f32)
    o_ref: (C, tho*Wo)          output tile, NCHW-flat layout (lane dim = M)
    p_ref: (tho, Wo, 9C)        VMEM scratch: im2col patch slab (bf16)
    """
    rt = pl.program_id(1)
    a0 = tho * rt  # first output-row (== row-pair) index of this tile

    # Build the im2col slab with 6 contiguous loads (no strided gathers):
    # tap (kh, kw) of output pixel (oh, ow) reads padded input (2*oh+kh, 2*ow+kw):
    #   kh in {0,1}: (a=oh,   s=kh);   kh == 2: (a=oh+1, s=0)
    #   kw in {0,1}: (j=ow,   lanes kw*C:(kw+1)*C)  -> one 2C-wide load covers both
    #   kw == 2    : (j=ow+1, lanes 0:C)
    for kh in range(3):
        a = a0 + (1 if kh == 2 else 0)
        s = kh if kh < 2 else 0
        k0 = 3 * kh * C
        # taps (kh,0) and (kh,1): single contiguous 2C-wide chunk.
        p_ref[:, :, k0:k0 + 2 * C] = x_ref[pl.ds(a, tho), s, 0:Wo, :]
        # tap (kh,2): low-C lanes, column offset +1.
        p_ref[:, :, k0 + 2 * C:k0 + 3 * C] = x_ref[pl.ds(a, tho), s, 1:1 + Wo, 0:C]

    # Single fused K=9C GEMM (bf16 MXU inputs, f32 accumulation) producing (C, M)
    # directly: contract the 9C dim of w_t with the 9C dim of p (transposed-RHS form),
    # so no f32 output transpose is needed and the store is lane-dense along M.
    p = p_ref[...].reshape(tho * Wo, 9 * C)                       # (M, 9C)
    acc = jax.lax.dot_general(
        w_ref[...], p,
        dimension_numbers=(((1,), (1,)), ((), ())),
        preferred_element_type=jnp.float32)                       # (C, M) f32
    o_ref[...] = (acc + b_ref[...]).astype(o_ref.dtype)           # bias: (C,1) broadcast


def downsample_forward(x_nchw, w_oihw, bias, t=None, *, row_tile=None):
    """Pallas equivalent of Downsample.forward(x, t); `t` is ignored as in PyTorch."""
    del t  # unused, exactly like the PyTorch module
    B, C, H, W = x_nchw.shape
    assert w_oihw.shape == (C, C, 3, 3)
    # TODO(synk): odd H/W (PyTorch floor semantics) not supported; even dims assumed.
    assert H % 2 == 0 and W % 2 == 0, "even spatial dims assumed (stride-2 conv)"
    Ho, Wo = H // 2, W // 2

    if row_tile is None:
        row_tile = Ho
        # v7x megacore: make sure the grid has at least 2 steps when B == 1.
        if B == 1 and Ho % 2 == 0 and ((Ho // 2) * Wo) % 128 == 0:
            row_tile = Ho // 2
    assert Ho % row_tile == 0
    # lane-dense output blocks: flattened tile width must be a 128-multiple (or full).
    assert row_tile == Ho or (row_tile * Wo) % 128 == 0
    n_row_tiles = Ho // row_tile
    M = row_tile * Wo

    # --- single fused layout pass: NCHW -> padded NHWC bf16; the trailing reshape that
    # pairs up rows (a,s) and columns (j,u) is free (contiguous) and is what lets the
    # kernel avoid strided loads entirely. ---
    x_pad = jnp.pad(
        jnp.transpose(x_nchw, (0, 2, 3, 1)).astype(jnp.bfloat16),
        ((0, 0), (1, 1), (1, 1), (0, 0)))                      # (B, H+2, W+2, C)
    x_r5 = x_pad.reshape(B, Ho + 1, 2, Wo + 1, 2 * C)

    # weights: OIHW -> (co, (kh, kw, ci)) to match the slab K ordering; bias (C, 1) f32.
    w_t = jnp.transpose(w_oihw, (0, 2, 3, 1)).reshape(C, 9 * C).astype(jnp.bfloat16)
    b2 = bias.reshape(C, 1).astype(jnp.float32)

    kernel = functools.partial(_downsample_kernel, tho=row_tile, Wo=Wo, C=C)
    out_flat = pl.pallas_call(
        kernel,
        out_shape=jax.ShapeDtypeStruct((B, C, Ho * Wo), x_nchw.dtype),
        grid=(B, n_row_tiles),   # rt innermost -> image/weights stay resident across rt
        in_specs=[
            pl.BlockSpec((None, Ho + 1, 2, Wo + 1, 2 * C),
                         lambda b, r: (b, 0, 0, 0, 0)),
            pl.BlockSpec((C, 9 * C), lambda b, r: (0, 0)),
            pl.BlockSpec((C, 1), lambda b, r: (0, 0)),
        ],
        out_specs=pl.BlockSpec((None, C, M), lambda b, r: (b, 0, r)),
        scratch_shapes=[pltpu.VMEM((row_tile, Wo, 9 * C), jnp.bfloat16)],
        compiler_params=pltpu.CompilerParams(
            dimension_semantics=("parallel", "parallel")),
    )(x_r5, w_t, b2)

    return out_flat.reshape(B, C, Ho, Wo)   # free (contiguous) reshape; already NCHW


if __name__ == "__main__":
    key = jax.random.PRNGKey(0)
    kx, kt, kw_key, kb_key = jax.random.split(key, 4)

    # Small shapes consistent with the module (n_channels = 32 in cddpm2.py).
    B, C, H, W = 2, 32, 32, 32
    x = jax.random.normal(kx, (B, C, H, W), jnp.float32)
    t = jax.random.normal(kt, (B,), jnp.float32)          # ignored by forward

    # Deterministic PyTorch-style Conv2d(C, C, 3, stride=2, padding=1) parameters.
    fan_in = C * 3 * 3
    bound = 1.0 / (fan_in ** 0.5)
    w = jax.random.uniform(kw_key, (C, C, 3, 3), jnp.float32, -bound, bound)  # OIHW
    b = jax.random.uniform(kb_key, (C,), jnp.float32, -bound, bound)

    # Reference: XLA conv on the same bf16-rounded inputs (kernel uses bf16 MXU inputs
    # with f32 accumulation, so products are exact; only summation order differs).
    xr = x.astype(jnp.bfloat16).astype(jnp.float32)
    wr = w.astype(jnp.bfloat16).astype(jnp.float32)
    ref = jax.lax.conv_general_dilated(
        xr, wr, window_strides=(2, 2), padding=((1, 1), (1, 1)),
        dimension_numbers=("NCHW", "OIHW", "NCHW"),
        precision=jax.lax.Precision.HIGHEST,
    ) + b[None, :, None, None]

    # Row-tiled path (grid = (2, 2), lane-dense 128-wide output blocks).
    out = jax.block_until_ready(downsample_forward(x, w, b, t, row_tile=8))
    assert out.shape == (B, C, H // 2, W // 2), out.shape
    err = float(jnp.max(jnp.abs(out - ref)))
    assert jnp.allclose(out, ref, atol=2e-3, rtol=2e-3), f"mismatch vs reference: {err}"

    # Default (whole-image) path.
    out2 = jax.block_until_ready(downsample_forward(x, w, b, t))
    err2 = float(jnp.max(jnp.abs(out2 - ref)))
    assert jnp.allclose(out2, ref, atol=2e-3, rtol=2e-3), f"mismatch vs reference: {err2}"

    print("KERNEL_OK")
</pallas_src>

<mosaic_0001>
module attributes {stable_mosaic.version = 11 : i64} {
  func.func @_downsample_kernel(%arg0: i32, %arg1: i32, %arg2: memref<1x17x2x17x64xbf16, #tpu.memory_space<vmem>>, %arg3: memref<32x288xbf16, #tpu.memory_space<vmem>>, %arg4: memref<32x1xf32, #tpu.memory_space<vmem>>, %arg5: memref<1x32x128xf32, #tpu.memory_space<vmem>>, %arg6: memref<8x16x288xbf16, #tpu.memory_space<vmem>>) attributes {dimension_semantics = [#tpu.dimension_semantics<parallel>, #tpu.dimension_semantics<parallel>], iteration_bounds = array<i64: 2, 2>, scalar_prefetch = 0 : i64, scratch_operands = 1 : i64, tpu.core_type = #tpu.core_type<tc>, window_params = [{transform_indices = @transform_0, window_bounds = array<i64: 1, 17, 2, 17, 64>}, {pipeline_mode = #tpu.pipeline_mode<synchronous>, transform_indices = @transform_1, window_bounds = array<i64: 32, 288>}, {pipeline_mode = #tpu.pipeline_mode<synchronous>, transform_indices = @transform_2, window_bounds = array<i64: 32, 1>}, {transform_indices = @transform_3, window_bounds = array<i64: 1, 32, 128>}]} {
    %c8_i32 = arith.constant 8 : i32
    %0 = arith.muli %c8_i32, %arg1 : i32
    %c0_i32 = arith.constant 0 : i32
    %1 = arith.addi %0, %c0_i32 : i32
    %c0 = arith.constant 0 : index
    %2 = arith.index_cast %1 : i32 to index
    %c0_0 = arith.constant 0 : index
    %c0_1 = arith.constant 0 : index
    %c0_2 = arith.constant 0 : index
    %3 = vector.load %arg2[%c0, %2, %c0_0, %c0_1, %c0_2] : memref<1x17x2x17x64xbf16, #tpu.memory_space<vmem>>, vector<1x8x1x16x64xbf16>
    %4 = vector.shape_cast %3 : vector<1x8x1x16x64xbf16> to vector<8x16x64xbf16>
    %c0_3 = arith.constant 0 : index
    %c0_4 = arith.constant 0 : index
    %c0_5 = arith.constant 0 : index
    %5 = vector.load %arg6[%c0_3, %c0_4, %c0_5] : memref<8x16x288xbf16, #tpu.memory_space<vmem>>, vector<8x16x64xbf16>
    tpu.vector_store %arg6[%c0_3, %c0_4, %c0_5], %4 {strides = array<i32>} : memref<8x16x288xbf16, #tpu.memory_space<vmem>>, vector<8x16x64xbf16>,
    %c0_6 = arith.constant 0 : index
    %6 = arith.index_cast %1 : i32 to index
    %c0_7 = arith.constant 0 : index
    %c1 = arith.constant 1 : index
    %c0_8 = arith.constant 0 : index
    %7 = vector.load %arg2[%c0_6, %6, %c0_7, %c1, %c0_8] : memref<1x17x2x17x64xbf16, #tpu.memory_space<vmem>>, vector<1x8x1x16x32xbf16>
    %8 = vector.shape_cast %7 : vector<1x8x1x16x32xbf16> to vector<8x16x32xbf16>
    %c0_9 = arith.constant 0 : index
    %c0_10 = arith.constant 0 : index
    %c64 = arith.constant 64 : index
    %9 = vector.load %arg6[%c0_9, %c0_10, %c64] : memref<8x16x288xbf16, #tpu.memory_space<vmem>>, vector<8x16x32xbf16>
    tpu.vector_store %arg6[%c0_9, %c0_10, %c64], %8 {strides = array<i32>} : memref<8x16x288xbf16, #tpu.memory_space<vmem>>, vector<8x16x32xbf16>,
    %c0_i32_11 = arith.constant 0 : i32
    %10 = arith.addi %0, %c0_i32_11 : i32
    %c0_12 = arith.constant 0 : index
    %11 = arith.index_cast %10 : i32 to index
    %c1_13 = arith.constant 1 : index
    %c0_14 = arith.constant 0 : index
    %c0_15 = arith.constant 0 : index
    %12 = vector.load %arg2[%c0_12, %11, %c1_13, %c0_14, %c0_15] : memref<1x17x2x17x64xbf16, #tpu.memory_space<vmem>>, vector<1x8x1x16x64xbf16>
    %13 = vector.shape_cast %12 : vector<1x8x1x16x64xbf16> to vector<8x16x64xbf16>
    %c0_16 = arith.constant 0 : index
    %c0_17 = arith.constant 0 : index
    %c96 = arith.constant 96 : index
    %14 = vector.load %arg6[%c0_16, %c0_17, %c96] : memref<8x16x288xbf16, #tpu.memory_space<vmem>>, vector<8x16x64xbf16>
    tpu.vector_store %arg6[%c0_16, %c0_17, %c96], %13 {strides = array<i32>} : memref<8x16x288xbf16, #tpu.memory_space<vmem>>, vector<8x16x64xbf16>,
    %c0_18 = arith.constant 0 : index
    %15 = arith.index_cast %10 : i32 to index
    %c1_19 = arith.constant 1 : index
    %c1_20 = arith.constant 1 : index
    %c0_21 = arith.constant 0 : index
    %16 = vector.load %arg2[%c0_18, %15, %c1_19, %c1_20, %c0_21] : memref<1x17x2x17x64xbf16, #tpu.memory_space<vmem>>, vector<1x8x1x16x32xbf16>
    %17 = vector.shape_cast %16 : vector<1x8x1x16x32xbf16> to vector<8x16x32xbf16>
    %c0_22 = arith.constant 0 : index
    %c0_23 = arith.constant 0 : index
    %c160 = arith.constant 160 : index
    %18 = vector.load %arg6[%c0_22, %c0_23, %c160] : memref<8x16x288xbf16, #tpu.memory_space<vmem>>, vector<8x16x32xbf16>
    tpu.vector_store %arg6[%c0_22, %c0_23, %c160], %17 {strides = array<i32>} : memref<8x16x288xbf16, #tpu.memory_space<vmem>>, vector<8x16x32xbf16>,
    %c1_i32 = arith.constant 1 : i32
    %19 = arith.addi %0, %c1_i32 : i32
    %c0_24 = arith.constant 0 : index
    %20 = arith.index_cast %19 : i32 to index
    %c0_25 = arith.constant 0 : index
    %c0_26 = arith.constant 0 : index
    %c0_27 = arith.constant 0 : index
    %21 = vector.load %arg2[%c0_24, %20, %c0_25, %c0_26, %c0_27] : memref<1x17x2x17x64xbf16, #tpu.memory_space<vmem>>, vector<1x8x1x16x64xbf16>
    %22 = vector.shape_cast %21 : vector<1x8x1x16x64xbf16> to vector<8x16x64xbf16>
    %c0_28 = arith.constant 0 : index
    %c0_29 = arith.constant 0 : index
    %c192 = arith.constant 192 : index
    %23 = vector.load %arg6[%c0_28, %c0_29, %c192] : memref<8x16x288xbf16, #tpu.memory_space<vmem>>, vector<8x16x64xbf16>
    tpu.vector_store %arg6[%c0_28, %c0_29, %c192], %22 {strides = array<i32>} : memref<8x16x288xbf16, #tpu.memory_space<vmem>>, vector<8x16x64xbf16>,
    %c0_30 = arith.constant 0 : index
    %24 = arith.index_cast %19 : i32 to index
    %c0_31 = arith.constant 0 : index
    %c1_32 = arith.constant 1 : index
    %c0_33 = arith.constant 0 : index
    %25 = vector.load %arg2[%c0_30, %24, %c0_31, %c1_32, %c0_33] : memref<1x17x2x17x64xbf16, #tpu.memory_space<vmem>>, vector<1x8x1x16x32xbf16>
    %26 = vector.shape_cast %25 : vector<1x8x1x16x32xbf16> to vector<8x16x32xbf16>
    %c0_34 = arith.constant 0 : index
    %c0_35 = arith.constant 0 : index
    %c256 = arith.constant 256 : index
    %27 = vector.load %arg6[%c0_34, %c0_35, %c256] : memref<8x16x288xbf16, #tpu.memory_space<vmem>>, vector<8x16x32xbf16>
    tpu.vector_store %arg6[%c0_34, %c0_35, %c256], %26 {strides = array<i32>} : memref<8x16x288xbf16, #tpu.memory_space<vmem>>, vector<8x16x32xbf16>,
    %c0_36 = arith.constant 0 : index
    %c0_37 = arith.constant 0 : index
    %c0_38 = arith.constant 0 : index
    %28 = vector.load %arg6[%c0_36, %c0_37, %c0_38] : memref<8x16x288xbf16, #tpu.memory_space<vmem>>, vector<8x16x288xbf16>
    %29 = vector.shape_cast %28 : vector<8x16x288xbf16> to vector<128x288xbf16>
    %c0_39 = arith.constant 0 : index
    %c0_40 = arith.constant 0 : index
    %30 = vector.load %arg3[%c0_39, %c0_40] : memref<32x288xbf16, #tpu.memory_space<vmem>>, vector<32x288xbf16>
    %cst = arith.constant dense<0.000000e+00> : vector<32x128xf32>
    %31 = tpu.matmul %30, %29, %cst {dimension_numbers = #tpu.dot_dimension_numbers<[1], [1], [0], [0], [0, 0, 1, 0], [], []>} : vector<32x288xbf16>, vector<128x288xbf16>, vector<32x128xf32> -> vector<32x128xf32>
    %c0_41 = arith.constant 0 : index
    %c0_42 = arith.constant 0 : index
    %32 = vector.load %arg4[%c0_41, %c0_42] : memref<32x1xf32, #tpu.memory_space<vmem>>, vector<32x1xf32>
    %33 = vector.broadcast %32 : vector<32x1xf32> to vector<32x128xf32>
    %34 = arith.addf %31, %33 : vector<32x128xf32>
    %c0_43 = arith.constant 0 : index
    %c0_44 = arith.constant 0 : index
    %c0_45 = arith.constant 0 : index
    %35 = vector.load %arg5[%c0_43, %c0_44, %c0_45] : memref<1x32x128xf32, #tpu.memory_space<vmem>>, vector<1x32x128xf32>
    %36 = vector.shape_cast %35 : vector<1x32x128xf32> to vector<32x128xf32>
    %37 = vector.shape_cast %34 : vector<32x128xf32> to vector<1x32x128xf32>
    tpu.vector_store %arg5[%c0_43, %c0_44, %c0_45], %37 {strides = array<i32>} : memref<1x32x128xf32, #tpu.memory_space<vmem>>, vector<1x32x128xf32>,
    return
  }
  func.func @transform_0(%arg0: i32, %arg1: i32) -> (i32, i32, i32, i32, i32) {
    %c0_i32 = arith.constant 0 : i32
    %c0_i32_0 = arith.constant 0 : i32
    %c0_i32_1 = arith.constant 0 : i32
    %c0_i32_2 = arith.constant 0 : i32
    %c0_i32_3 = arith.constant 0 : i32
    return %arg0, %c0_i32, %c0_i32_0, %c0_i32_1, %c0_i32_2 : i32, i32, i32, i32, i32
  }
  func.func @transform_1(%arg0: i32, %arg1: i32) -> (i32, i32) {
    %c0_i32 = arith.constant 0 : i32
    %c0_i32_0 = arith.constant 0 : i32
    %c0_i32_1 = arith.constant 0 : i32
    return %c0_i32, %c0_i32_0 : i32, i32
  }
  func.func @transform_2(%arg0: i32, %arg1: i32) -> (i32, i32) {
    %c0_i32 = arith.constant 0 : i32
    %c0_i32_0 = arith.constant 0 : i32
    %c0_i32_1 = arith.constant 0 : i32
    return %c0_i32, %c0_i32_0 : i32, i32
  }
  func.func @transform_3(%arg0: i32, %arg1: i32) -> (i32, i32, i32) {
    %c0_i32 = arith.constant 0 : i32
    %c0_i32_0 = arith.constant 0 : i32
    return %arg0, %c0_i32, %arg1 : i32, i32, i32
  }
}

</mosaic_0001>

<llo_original>
// kernel: tpu_custom_call.1
$region0: #{tpu_custom_call.1}
  #allocation0 [shape = 'u32[]', space=smem, size = 0x4, offset = 0x4, fixed_abs, tag = 'smem constant byte address 0x4 - core index']
  #allocation1 [shape = 'u32[72,128]{1,0:T(1,128)}', space=vmem, size = 0x9000, scoped, tag = 'internal scratch']
  #allocation2 [shape = 'bf16[8,16,288]{2,1,0:T(8,128)(2,1)}', space=vmem, size = 0x18000, scoped, tag = 'scratch operand']
  %s0 = inlined_call_operand.vmem [shape: bf16[2,17,2,17,64], index: 0, kind: input, shape index: {}]
  %s1 = inlined_call_operand.vmem [shape: bf16[32,288], index: 1, kind: input, shape index: {}]
  %s2 = inlined_call_operand.vmem [shape: f32[32,1], index: 2, kind: input, shape index: {}]
  %s3 = inlined_call_operand.hbm [shape: f32[2,32,256], index: 3, kind: output, shape index: {}]
  %s4 = sld [smem:[#allocation0]]
  $region45: #{tpu_custom_call.1} parent=0
    _
  %s6 = ssub.s32 1, %s4
  %s7 = scalar_select 0, %s6, %s4
  $region1: #{tpu_custom_call.1} parent=0
    #allocation3 [shape = 'u8[32768]{0}', space=vmem, size = 0x8000, scoped, tag = 'output window, operand 0']
    #allocation4 [shape = 's32[2]{0}', space=sflag, size = 0x8, scoped, tag = 'scoped memory for tpu_custom_call.1']
    %8 = vsyncpa [#allocation4], 0
    %s9 = scalar_lea.sflag [#allocation4], 1
    %10 = vsyncpa %s9, 0
    loop: start=0, step=1, limit=6
    $region2: #{tpu_custom_call.1} parent=1 // loop_pre_header
      _
    $region3: #{tpu_custom_call.1} parent=1 // loop_header
      %s12 = sphi 0, %s16
      %p13 = scmp.ge.s32.totalorder %s12, 6
      %s19 = sphi 0, %s31
      %s20 = sphi 0, %s27
      %s21 = sphi 0, %s19
      %s22 = sphi 0, %s20
      %s23 = sphi 0, %s21
      %s24 = sphi 0, %s22
      %s34 = sphi 0, %s36
      %s37 = sphi 0, %s34
      %s38 = sphi 0, %s37
      %s54 = sphi 0, %s38
      %s58 = sphi 0, %s58
      %s60 = sphi 0, %s58
      %s61 = sphi 0, %s60
      %s75 = sphi 0, %s61
      %s79 = sphi 0, %s79
      %s81 = sphi 0, %s79
      %s82 = sphi 0, %s81
      %s96 = sphi 0, %s82
      %s104 = sphi 0, %s106
      %s107 = sphi 0, %s104
      %s108 = sphi 0, %s107
      %s124 = sphi 0, %s108
    $region4: #{tpu_custom_call.1} parent=1 // loop_header_branch
      %15 = sbr.rel (%p13) target = $region8
    $region5: #{tpu_custom_call.1} parent=1 // loop_body
      %s17 = ssub.s32 %s12, 1
      %s18 = ssub.s32 %s12, 2
      %s25 = sadd.s32 1, %s20
      %p26 = scmp.ge.s32.totalorder %s25, 2
      %s27 = scalar_select %p26, 0, %s25
      %s28 = sadd.s32 1, %s19
      %s29 = scalar_select %p26, %s28, %s19
      %p30 = scmp.ge.s32.totalorder %s29, 2
      %s31 = scalar_select %p30, 0, %s29
      %s32 = ssub.s32 %s19, %s31
      %p33 = scmp.eq.s32.totalorder %s32, 0
      %s35 = sadd.s32 %s34, 1
      %s36 = scalar_select %p33, %s34, %s35
      %p39 = pneg %p33
      %p40 = scmp.eq.s32.totalorder %s12, 3
      %p41 = por %p39, %p40
      %p42 = scmp.ne.s32.totalorder %s34, %s37
      %p43 = scmp.eq.s32.totalorder %s12, 0
      %p44 = por %p42, %p43
      %p45 = scmp.ne.s32.totalorder %s34, %s37
      %p46 = scmp.eq.s32.totalorder %s17, 3
      %p47 = por %p45, %p46
      %p48 = scmp.ne.s32.totalorder %s37, %s38
      %p49 = scmp.eq.s32.totalorder %s17, 0
      %p50 = por %p48, %p49
      %p51 = scmp.ne.s32.totalorder %s37, %s38
      %p52 = scmp.eq.s32.totalorder %s18, 3
      %p53 = por %p51, %p52
      %p55 = scmp.ne.s32.totalorder %s38, %s54
      %p56 = scmp.eq.s32.totalorder %s18, 0
      %p57 = por %p55, %p56
      %s59 = sadd.s32 %s58, 1
      %p62 = scmp.eq.s32.totalorder %s12, 3
      %p63 = scmp.ne.s32.totalorder %s58, %s60
      %p64 = scmp.eq.s32.totalorder %s12, 0
      %p65 = por %p63, %p64
      %p66 = scmp.ne.s32.totalorder %s58, %s60
      %p67 = scmp.eq.s32.totalorder %s17, 3
      %p68 = por %p66, %p67
      %p69 = scmp.ne.s32.totalorder %s60, %s61
      %p70 = scmp.eq.s32.totalorder %s17, 0
      %p71 = por %p69, %p70
      %p72 = scmp.ne.s32.totalorder %s60, %s61
      %p73 = scmp.eq.s32.totalorder %s18, 3
      %p74 = por %p72, %p73
      %p76 = scmp.ne.s32.totalorder %s61, %s75
      %p77 = scmp.eq.s32.totalorder %s18, 0
      %p78 = por %p76, %p77
      %s80 = sadd.s32 %s79, 1
      %p83 = scmp.eq.s32.totalorder %s12, 3
      %p84 = scmp.ne.s32.totalorder %s79, %s81
      %p85 = scmp.eq.s32.totalorder %s12, 0
      %p86 = por %p84, %p85
      %p87 = scmp.ne.s32.totalorder %s79, %s81
      %p88 = scmp.eq.s32.totalorder %s17, 3
      %p89 = por %p87, %p88
      %p90 = scmp.ne.s32.totalorder %s81, %s82
      %p91 = scmp.eq.s32.totalorder %s17, 0
      %p92 = por %p90, %p91
      %p93 = scmp.ne.s32.totalorder %s81, %s82
      %p94 = scmp.eq.s32.totalorder %s18, 3
      %p95 = por %p93, %p94
      %p97 = scmp.ne.s32.totalorder %s82, %s96
      %p98 = scmp.eq.s32.totalorder %s18, 0
      %p99 = por %p97, %p98
      %s100 = ssub.s32 %s19, %s31
      %s101 = ssub.s32 %s20, %s27
      %s102 = sor.u32 %s100, %s101
      %p103 = scmp.eq.s32.totalorder %s102, 0
      %s105 = sadd.s32 %s104, 1
      %s106 = scalar_select %p103, %s104, %s105
      %p109 = pneg %p103
      %p110 = scmp.eq.s32.totalorder %s12, 3
      %p111 = por %p109, %p110
      %p112 = scmp.ne.s32.totalorder %s104, %s107
      %p113 = scmp.eq.s32.totalorder %s12, 0
      %p114 = por %p112, %p113
      %p115 = scmp.ne.s32.totalorder %s104, %s107
      %p116 = scmp.eq.s32.totalorder %s17, 3
      %p117 = por %p115, %p116
      %p118 = scmp.ne.s32.totalorder %s107, %s108
      %p119 = scmp.eq.s32.totalorder %s17, 0
      %p120 = por %p118, %p119
      %p121 = scmp.ne.s32.totalorder %s107, %s108
      %p122 = scmp.eq.s32.totalorder %s18, 3
      %p123 = por %p121, %p122
      %p125 = scmp.ne.s32.totalorder %s108, %s124
      %p126 = scmp.eq.s32.totalorder %s18, 0
      %p127 = por %p125, %p126
      %p128 = scmp.le.s32.totalorder 1, %s12
      %p129 = scmp.lt.s32.totalorder %s12, 5
      %p130 = pnand %p128, %p129
      %p131 = pneg %p130
      // Predicated region
      $region9: #{tpu_custom_call.1} parent=5 // pred_check
        _
      $region10: #{tpu_custom_call.1} parent=5 // pred_check_branch
        %133 = sbr.rel (%p130) target = $region12
      $region11: #{tpu_custom_call.1} parent=5 // pred_region
        %s134 = ssub.s32 %s12, 1
        // Predicated region
        $region13: #{tpu_custom_call.1} parent=11 // pred_check
          %p135 = pneg %p71
        $region14: #{tpu_custom_call.1} parent=11 // pred_check_branch
          %137 = sbr.rel (%p135) target = $region16
        $region15: #{tpu_custom_call.1} parent=11 // pred_region
          _
        $region16: #{tpu_custom_call.1} parent=11 // pred_fallthru
          _
        // Predicated region
        $region17: #{tpu_custom_call.1} parent=11 // pred_check
          %p138 = pneg %p92
        $region18: #{tpu_custom_call.1} parent=11 // pred_check_branch
          %140 = sbr.rel (%p138) target = $region20
        $region19: #{tpu_custom_call.1} parent=11 // pred_region
          _
        $region20: #{tpu_custom_call.1} parent=11 // pred_fallthru
          _
      $region12: #{tpu_custom_call.1} parent=5 // pred_fallthru
        _
      %p141 = scmp.lt.s32.totalorder %s12, 4
      // Predicated region
      $region21: #{tpu_custom_call.1} parent=5 // pred_check
        %p142 = pneg %p141
      $region22: #{tpu_custom_call.1} parent=5 // pred_check_branch
        %144 = sbr.rel (%p142) target = $region24
      $region23: #{tpu_custom_call.1} parent=5 // pred_region
        // Predicated region
        $region25: #{tpu_custom_call.1} parent=23 // pred_check
          %p145 = pneg %p44
        $region26: #{tpu_custom_call.1} parent=23 // pred_check_branch
          %147 = sbr.rel (%p145) target = $region28
        $region27: #{tpu_custom_call.1} parent=23 // pred_region
          %p148 = scmp.lt.s32.totalorder %s19, 1
          %s149 = scalar_select %p148, %s19, 1
          %s150 = smul.addr %s149, 102
          %s151 = smul.addr %s150, 4
          %s152 = scalar_lea.vmem %s0, %s151
        $region28: #{tpu_custom_call.1} parent=23 // pred_fallthru
          _
      $region24: #{tpu_custom_call.1} parent=5 // pred_fallthru
        _
      %p153 = scmp.le.s32.totalorder 1, %s12
      %p154 = scmp.lt.s32.totalorder %s12, 5
      %p155 = pnand %p153, %p154
      %p156 = pneg %p155
      // Predicated region
      $region29: #{tpu_custom_call.1} parent=5 // pred_check
        _
      $region30: #{tpu_custom_call.1} parent=5 // pred_check_branch
        %158 = sbr.rel (%p155) target = $region32
      $region31: #{tpu_custom_call.1} parent=5 // pred_region
        %s159 = ssub.s32 %s12, 1
        %p160 = scmp.lt.s32.totalorder %s21, 1
        %s161 = scalar_select %p160, %s21, 1
        %s162 = smul.addr %s161, 102
        %s163 = smul.addr %s162, 4
        %s164 = scalar_lea.vmem %s0, %s163
        %p165 = pneg %p50
        %p166 = pneg %p47
        %p167 = pneg %p71
        %p168 = pneg %p68
        %p169 = pneg %p92
        %p170 = pneg %p89
        %p171 = pneg %p120
        %p172 = pneg %p117
        %s173 = sand.u32 %s107, 1
        %s174 = scalar_lea.sflag [#allocation4], %s173
        %s175 = sand.u32 %s107, 1
        %s176 = smul.addr %s175, 32
        %s177 = scalar_lea.vmem [#allocation3], %s176
        %p178 = scmp.lt.s32.totalorder %s21, 1
        %s179 = scalar_select %p178, %s21, 1
        %s180 = smul.addr %s179, 102
        %s181 = smul.addr %s180, 4
        %s182 = scalar_lea.vmem %s0, %s181
        %s183 = smul.u32 %s22, 8
        %s184 = smul.u32 %s183, 6
        %s185 = smul.addr %s184, 4
        %s186 = scalar_lea.vmem %s182, %s185
        %v187 = vld [vmem:[%s186] sm:$0xf]
        %v188 = vld [vmem:[%s186 + $0x4] sm:$0xf]
        %v189 = vld [vmem:[%s186 + $0x18] sm:$0xf]
        %v190 = vld [vmem:[%s186 + $0x1c] sm:$0xf]
        %v191 = vld [vmem:[%s186 + $0x30] sm:$0xf]
        %v192 = vld [vmem:[%s186 + $0x34] sm:$0xf]
        %v193 = vld [vmem:[%s186 + $0x48] sm:$0xf]
        %v194 = vld [vmem:[%s186 + $0x4c] sm:$0xf]
        %v195 = vld [vmem:[%s186 + $0x60] sm:$0xf]
        %v196 = vld [vmem:[%s186 + $0x64] sm:$0xf]
        %v197 = vld [vmem:[%s186 + $0x78] sm:$0xf]
        %v198 = vld [vmem:[%s186 + $0x7c] sm:$0xf]
        %v199 = vld [vmem:[%s186 + $0x90] sm:$0xf]
        %v200 = vld [vmem:[%s186 + $0x94] sm:$0xf]
        %v201 = vld [vmem:[%s186 + $0xa8] sm:$0xf]
        %v202 = vld [vmem:[%s186 + $0xac] sm:$0xf]
        %vm203 = vcmask 519168
        %204 = vst.msk [vmem:[#allocation2] sm:$0xf] %vm203, %v187
        %205 = vst.msk [vmem:[#allocation2 + $0xc] sm:$0xf] %vm203, %v188
        %206 = vst.msk [vmem:[#allocation2 + $0x18] sm:$0xf] %vm203, %v189
        %207 = vst.msk [vmem:[#allocation2 + $0x24] sm:$0xf] %vm203, %v190
        %208 = vst.msk [vmem:[#allocation2 + $0x30] sm:$0xf] %vm203, %v191
        %209 = vst.msk [vmem:[#allocation2 + $0x3c] sm:$0xf] %vm203, %v192
        %210 = vst.msk [vmem:[#allocation2 + $0x48] sm:$0xf] %vm203, %v193
        %211 = vst.msk [vmem:[#allocation2 + $0x54] sm:$0xf] %vm203, %v194
        %212 = vst.msk [vmem:[#allocation2 + $0x60] sm:$0xf] %vm203, %v195
        %213 = vst.msk [vmem:[#allocation2 + $0x6c] sm:$0xf] %vm203, %v196
        %214 = vst.msk [vmem:[#allocation2 + $0x78] sm:$0xf] %vm203, %v197
        %215 = vst.msk [vmem:[#allocation2 + $0x84] sm:$0xf] %vm203, %v198
        %216 = vst.msk [vmem:[#allocation2 + $0x90] sm:$0xf] %vm203, %v199
        %217 = vst.msk [vmem:[#allocation2 + $0x9c] sm:$0xf] %vm203, %v200
        %218 = vst.msk [vmem:[#allocation2 + $0xa8] sm:$0xf] %vm203, %v201
        %219 = vst.msk [vmem:[#allocation2 + $0xb4] sm:$0xf] %vm203, %v202
        %v220 = vld [vmem:[%s186] sm:$0xf]
        %v221 = vld [vmem:[%s186 + $0x4] sm:$0xf]
        %v222 = vld [vmem:[%s186 + $0x8] sm:$0x1]
        %v223 = vld [vmem:[%s186 + $0x18] sm:$0xf]
        %v224 = vld [vmem:[%s186 + $0x1c] sm:$0xf]
        %v225 = vld [vmem:[%s186 + $0x20] sm:$0x1]
        %v226 = vld [vmem:[%s186 + $0x30] sm:$0xf]
        %v227 = vld [vmem:[%s186 + $0x34] sm:$0xf]
        %v228 = vld [vmem:[%s186 + $0x38] sm:$0x1]
        %v229 = vld [vmem:[%s186 + $0x48] sm:$0xf]
        %v230 = vld [vmem:[%s186 + $0x4c] sm:$0xf]
        %v231 = vld [vmem:[%s186 + $0x50] sm:$0x1]
        %v232 = vld [vmem:[%s186 + $0x60] sm:$0xf]
        %v233 = vld [vmem:[%s186 + $0x64] sm:$0xf]
        %v234 = vld [vmem:[%s186 + $0x68] sm:$0x1]
        %v235 = vld [vmem:[%s186 + $0x78] sm:$0xf]
        %v236 = vld [vmem:[%s186 + $0x7c] sm:$0xf]
        %v237 = vld [vmem:[%s186 + $0x80] sm:$0x1]
        %v238 = vld [vmem:[%s186 + $0x90] sm:$0xf]
        %v239 = vld [vmem:[%s186 + $0x94] sm:$0xf]
        %v240 = vld [vmem:[%s186 + $0x98] sm:$0x1]
        %v241 = vld [vmem:[%s186 + $0xa8] sm:$0xf]
        %v242 = vld [vmem:[%s186 + $0xac] sm:$0xf]
        %v243 = vld [vmem:[%s186 + $0xb0] sm:$0x1]
        %vm244 = vsmask.f32 3328
        %vm245 = vsmask.f32 7440
        %vm246 = vmor %vm244, %vm245
        %v248 = vshrl.u32 %v220, 16
        %v250 = vrot.slane %v248, 4
        %v251 = vshll.u32 %v220, 16
        %v253 = vrot.slane %v251, 5
        %v254 = vor.u32 %v250, %v253
        %v255 = vrot.slane %v254, 4
        %v257 = vshll.u32 %v221, 16
        %v259 = vrot.slane %v257, 5
        %v260 = vsel %vm246, %v255, %v259
        %v261 = vshrl.u32 %v221, 16
        %v263 = vrot.slane %v261, 4
        %v264 = vor.u32 %v263, %v259
        %v265 = vrot.slane %v264, 4
        %v267 = vshll.u32 %v222, 16
        %v269 = vrot.slane %v267, 5
        %v270 = vsel %vm246, %v265, %v269
        %v272 = vshrl.u32 %v223, 16
        %v274 = vrot.slane %v272, 4
        %v275 = vshll.u32 %v223, 16
        %v277 = vrot.slane %v275, 5
        %v278 = vor.u32 %v274, %v277
        %v279 = vrot.slane %v278, 4
        %v281 = vshll.u32 %v224, 16
        %v283 = vrot.slane %v281, 5
        %v284 = vsel %vm246, %v279, %v283
        %v285 = vshrl.u32 %v224, 16
        %v287 = vrot.slane %v285, 4
        %v288 = vor.u32 %v287, %v283
        %v289 = vrot.slane %v288, 4
        %v291 = vshll.u32 %v225, 16
        %v293 = vrot.slane %v291, 5
        %v294 = vsel %vm246, %v289, %v293
        %v296 = vshrl.u32 %v226, 16
        %v298 = vrot.slane %v296, 4
        %v299 = vshll.u32 %v226, 16
        %v301 = vrot.slane %v299, 5
        %v302 = vor.u32 %v298, %v301
        %v303 = vrot.slane %v302, 4
        %v305 = vshll.u32 %v227, 16
        %v307 = vrot.slane %v305, 5
        %v308 = vsel %vm246, %v303, %v307
        %v309 = vshrl.u32 %v227, 16
        %v311 = vrot.slane %v309, 4
        %v312 = vor.u32 %v311, %v307
        %v313 = vrot.slane %v312, 4
        %v315 = vshll.u32 %v228, 16
        %v317 = vrot.slane %v315, 5
        %v318 = vsel %vm246, %v313, %v317
        %v320 = vshrl.u32 %v229, 16
        %v322 = vrot.slane %v320, 4
        %v323 = vshll.u32 %v229, 16
        %v325 = vrot.slane %v323, 5
        %v326 = vor.u32 %v322, %v325
        %v327 = vrot.slane %v326, 4
        %v329 = vshll.u32 %v230, 16
        %v331 = vrot.slane %v329, 5
        %v332 = vsel %vm246, %v327, %v331
        %v333 = vshrl.u32 %v230, 16
        %v335 = vrot.slane %v333, 4
        %v336 = vor.u32 %v335, %v331
        %v337 = vrot.slane %v336, 4
        %v339 = vshll.u32 %v231, 16
        %v341 = vrot.slane %v339, 5
        %v342 = vsel %vm246, %v337, %v341
        %v344 = vshrl.u32 %v232, 16
        %v346 = vrot.slane %v344, 4
        %v347 = vshll.u32 %v232, 16
        %v349 = vrot.slane %v347, 5
        %v350 = vor.u32 %v346, %v349
        %v351 = vrot.slane %v350, 4
        %v353 = vshll.u32 %v233, 16
        %v355 = vrot.slane %v353, 5
        %v356 = vsel %vm246, %v351, %v355
        %v357 = vshrl.u32 %v233, 16
        %v359 = vrot.slane %v357, 4
        %v360 = vor.u32 %v359, %v355
        %v361 = vrot.slane %v360, 4
        %v363 = vshll.u32 %v234, 16
        %v365 = vrot.slane %v363, 5
        %v366 = vsel %vm246, %v361, %v365
        %v368 = vshrl.u32 %v235, 16
        %v370 = vrot.slane %v368, 4
        %v371 = vshll.u32 %v235, 16
        %v373 = vrot.slane %v371, 5
        %v374 = vor.u32 %v370, %v373
        %v375 = vrot.slane %v374, 4
        %v377 = vshll.u32 %v236, 16
        %v379 = vrot.slane %v377, 5
        %v380 = vsel %vm246, %v375, %v379
        %v381 = vshrl.u32 %v236, 16
        %v383 = vrot.slane %v381, 4
        %v384 = vor.u32 %v383, %v379
        %v385 = vrot.slane %v384, 4
        %v387 = vshll.u32 %v237, 16
        %v389 = vrot.slane %v387, 5
        %v390 = vsel %vm246, %v385, %v389
        %v392 = vshrl.u32 %v238, 16
        %v394 = vrot.slane %v392, 4
        %v395 = vshll.u32 %v238, 16
        %v397 = vrot.slane %v395, 5
        %v398 = vor.u32 %v394, %v397
        %v399 = vrot.slane %v398, 4
        %v401 = vshll.u32 %v239, 16
        %v403 = vrot.slane %v401, 5
        %v404 = vsel %vm246, %v399, %v403
        %v405 = vshrl.u32 %v239, 16
        %v407 = vrot.slane %v405, 4
        %v408 = vor.u32 %v407, %v403
        %v409 = vrot.slane %v408, 4
        %v411 = vshll.u32 %v240, 16
        %v413 = vrot.slane %v411, 5
        %v414 = vsel %vm246, %v409, %v413
        %v416 = vshrl.u32 %v241, 16
        %v418 = vrot.slane %v416, 4
        %v419 = vshll.u32 %v241, 16
        %v421 = vrot.slane %v419, 5
        %v422 = vor.u32 %v418, %v421
        %v423 = vrot.slane %v422, 4
        %v425 = vshll.u32 %v242, 16
        %v427 = vrot.slane %v425, 5
        %v428 = vsel %vm246, %v423, %v427
        %v429 = vshrl.u32 %v242, 16
        %v431 = vrot.slane %v429, 4
        %v432 = vor.u32 %v431, %v427
        %v433 = vrot.slane %v432, 4
        %v435 = vshll.u32 %v243, 16
        %v437 = vrot.slane %v435, 5
        %v438 = vsel %vm246, %v433, %v437
        %439 = vrot.lane.b32.xlu0 %v260, 64
        %v440 = vpop.permute.xlu0 %439
        %441 = vrot.lane.b32.xlu0 %v270, 64
        %v442 = vpop.permute.xlu0 %441
        %443 = vrot.lane.b32.xlu0 %v284, 64
        %v444 = vpop.permute.xlu0 %443
        %445 = vrot.lane.b32.xlu0 %v294, 64
        %v446 = vpop.permute.xlu0 %445
        %447 = vrot.lane.b32.xlu0 %v308, 64
        %v448 = vpop.permute.xlu0 %447
        %449 = vrot.lane.b32.xlu0 %v318, 64
        %v450 = vpop.permute.xlu0 %449
        %451 = vrot.lane.b32.xlu0 %v332, 64
        %v452 = vpop.permute.xlu0 %451
        %453 = vrot.lane.b32.xlu0 %v342, 64
        %v454 = vpop.permute.xlu0 %453
        %455 = vrot.lane.b32.xlu0 %v356, 64
        %v456 = vpop.permute.xlu0 %455
        %457 = vrot.lane.b32.xlu0 %v366, 64
        %v458 = vpop.permute.xlu0 %457
        %459 = vrot.lane.b32.xlu0 %v380, 64
        %v460 = vpop.permute.xlu0 %459
        %461 = vrot.lane.b32.xlu0 %v390, 64
        %v462 = vpop.permute.xlu0 %461
        %463 = vrot.lane.b32.xlu0 %v404, 64
        %v464 = vpop.permute.xlu0 %463
        %465 = vrot.lane.b32.xlu0 %v414, 64
        %v466 = vpop.permute.xlu0 %465
        %467 = vrot.lane.b32.xlu0 %v428, 64
        %v468 = vpop.permute.xlu0 %467
        %469 = vrot.lane.b32.xlu0 %v438, 64
        %v470 = vpop.permute.xlu0 %469
        %vm487 = vcmask 781824
        %488 = vst.msk [vmem:[#allocation2] sm:$0xf] %vm487, %v440
        %489 = vst.msk [vmem:[#allocation2 + $0xc] sm:$0xf] %vm487, %v442
        %490 = vst.msk [vmem:[#allocation2 + $0x18] sm:$0xf] %vm487, %v444
        %491 = vst.msk [vmem:[#allocation2 + $0x24] sm:$0xf] %vm487, %v446
        %492 = vst.msk [vmem:[#allocation2 + $0x30] sm:$0xf] %vm487, %v448
        %493 = vst.msk [vmem:[#allocation2 + $0x3c] sm:$0xf] %vm487, %v450
        %494 = vst.msk [vmem:[#allocation2 + $0x48] sm:$0xf] %vm487, %v452
        %495 = vst.msk [vmem:[#allocation2 + $0x54] sm:$0xf] %vm487, %v454
        %496 = vst.msk [vmem:[#allocation2 + $0x60] sm:$0xf] %vm487, %v456
        %497 = vst.msk [vmem:[#allocation2 + $0x6c] sm:$0xf] %vm487, %v458
        %498 = vst.msk [vmem:[#allocation2 + $0x78] sm:$0xf] %vm487, %v460
        %499 = vst.msk [vmem:[#allocation2 + $0x84] sm:$0xf] %vm487, %v462
        %500 = vst.msk [vmem:[#allocation2 + $0x90] sm:$0xf] %vm487, %v464
        %501 = vst.msk [vmem:[#allocation2 + $0x9c] sm:$0xf] %vm487, %v466
        %502 = vst.msk [vmem:[#allocation2 + $0xa8] sm:$0xf] %vm487, %v468
        %503 = vst.msk [vmem:[#allocation2 + $0xb4] sm:$0xf] %vm487, %v470
        %s504 = sadd.s32 3, %s184
        %s505 = smul.addr %s504, 4
        %s506 = scalar_lea.vmem %s182, %s505
        %v507 = vld [vmem:[%s506] sm:$0xf]
        %v508 = vld [vmem:[%s506 + $0x4] sm:$0xf]
        %v509 = vld [vmem:[%s506 + $0x18] sm:$0xf]
        %v510 = vld [vmem:[%s506 + $0x1c] sm:$0xf]
        %v511 = vld [vmem:[%s506 + $0x30] sm:$0xf]
        %v512 = vld [vmem:[%s506 + $0x34] sm:$0xf]
        %v513 = vld [vmem:[%s506 + $0x48] sm:$0xf]
        %v514 = vld [vmem:[%s506 + $0x4c] sm:$0xf]
        %v515 = vld [vmem:[%s506 + $0x60] sm:$0xf]
        %v516 = vld [vmem:[%s506 + $0x64] sm:$0xf]
        %v517 = vld [vmem:[%s506 + $0x78] sm:$0xf]
        %v518 = vld [vmem:[%s506 + $0x7c] sm:$0xf]
        %v519 = vld [vmem:[%s506 + $0x90] sm:$0xf]
        %v520 = vld [vmem:[%s506 + $0x94] sm:$0xf]
        %v521 = vld [vmem:[%s506 + $0xa8] sm:$0xf]
        %v522 = vld [vmem:[%s506 + $0xac] sm:$0xf]
        %539 = vrot.lane.b32.xlu0 %v507, 96
        %v540 = vpop.permute.xlu0 %539
        %541 = vrot.lane.b32.xlu0 %v508, 96
        %v542 = vpop.permute.xlu0 %541
        %543 = vrot.lane.b32.xlu0 %v509, 96
        %v544 = vpop.permute.xlu0 %543
        %545 = vrot.lane.b32.xlu0 %v510, 96
        %v546 = vpop.permute.xlu0 %545
        %547 = vrot.lane.b32.xlu0 %v511, 96
        %v548 = vpop.permute.xlu0 %547
        %549 = vrot.lane.b32.xlu0 %v512, 96
        %v550 = vpop.permute.xlu0 %549
        %551 = vrot.lane.b32.xlu0 %v513, 96
        %v552 = vpop.permute.xlu0 %551
        %553 = vrot.lane.b32.xlu0 %v514, 96
        %v554 = vpop.permute.xlu0 %553
        %555 = vrot.lane.b32.xlu0 %v515, 96
        %v556 = vpop.permute.xlu0 %555
        %557 = vrot.lane.b32.xlu0 %v516, 96
        %v558 = vpop.permute.xlu0 %557
        %559 = vrot.lane.b32.xlu0 %v517, 96
        %v560 = vpop.permute.xlu0 %559
        %561 = vrot.lane.b32.xlu0 %v518, 96
        %v562 = vpop.permute.xlu0 %561
        %563 = vrot.lane.b32.xlu0 %v519, 96
        %v564 = vpop.permute.xlu0 %563
        %565 = vrot.lane.b32.xlu0 %v520, 96
        %v566 = vpop.permute.xlu0 %565
        %567 = vrot.lane.b32.xlu0 %v521, 96
        %v568 = vpop.permute.xlu0 %567
        %569 = vrot.lane.b32.xlu0 %v522, 96
        %v570 = vpop.permute.xlu0 %569
        %v571 = vrot.slane %v540, 4
        %v572 = vrot.slane %v542, 4
        %v573 = vrot.slane %v544, 4
        %v574 = vrot.slane %v546, 4
        %v575 = vrot.slane %v548, 4
        %v576 = vrot.slane %v550, 4
        %v577 = vrot.slane %v552, 4
        %v578 = vrot.slane %v554, 4
        %v579 = vrot.slane %v556, 4
        %v580 = vrot.slane %v558, 4
        %v581 = vrot.slane %v560, 4
        %v582 = vrot.slane %v562, 4
        %v583 = vrot.slane %v564, 4
        %v584 = vrot.slane %v566, 4
        %v585 = vrot.slane %v568, 4
        %v586 = vrot.slane %v570, 4
        %vm587 = vcmask 785408
        %v588 = vsel %vm587, %v571, %v540
        %v589 = vsel %vm587, %v572, %v542
        %v590 = vsel %vm587, %v573, %v544
        %v591 = vsel %vm587, %v574, %v546
        %v592 = vsel %vm587, %v575, %v548
        %v593 = vsel %vm587, %v576, %v550
        %v594 = vsel %vm587, %v577, %v552
        %v595 = vsel %vm587, %v578, %v554
        %v596 = vsel %vm587, %v579, %v556
        %v597 = vsel %vm587, %v580, %v558
        %v598 = vsel %vm587, %v581, %v560
        %v599 = vsel %vm587, %v582, %v562
        %v600 = vsel %vm587, %v583, %v564
        %v601 = vsel %vm587, %v584, %v566
        %v602 = vsel %vm587, %v585, %v568
        %v603 = vsel %vm587, %v586, %v570
        %vm620 = vcmask 1044224
        %vm621 = vcmask 261124
        %vm622 = vmor %vm621, %vm620
        %623 = vst.msk [vmem:[#allocation2] sm:$0xff] %vm622, %v588
        %624 = vst.msk [vmem:[#allocation2 + $0xc] sm:$0xff] %vm622, %v589
        %625 = vst.msk [vmem:[#allocation2 + $0x18] sm:$0xff] %vm622, %v590
        %626 = vst.msk [vmem:[#allocation2 + $0x24] sm:$0xff] %vm622, %v591
        %627 = vst.msk [vmem:[#allocation2 + $0x30] sm:$0xff] %vm622, %v592
        %628 = vst.msk [vmem:[#allocation2 + $0x3c] sm:$0xff] %vm622, %v593
        %629 = vst.msk [vmem:[#allocation2 + $0x48] sm:$0xff] %vm622, %v594
        %630 = vst.msk [vmem:[#allocation2 + $0x54] sm:$0xff] %vm622, %v595
        %631 = vst.msk [vmem:[#allocation2 + $0x60] sm:$0xff] %vm622, %v596
        %632 = vst.msk [vmem:[#allocation2 + $0x6c] sm:$0xff] %vm622, %v597
        %633 = vst.msk [vmem:[#allocation2 + $0x78] sm:$0xff] %vm622, %v598
        %634 = vst.msk [vmem:[#allocation2 + $0x84] sm:$0xff] %vm622, %v599
        %635 = vst.msk [vmem:[#allocation2 + $0x90] sm:$0xff] %vm622, %v600
        %636 = vst.msk [vmem:[#allocation2 + $0x9c] sm:$0xff] %vm622, %v601
        %637 = vst.msk [vmem:[#allocation2 + $0xa8] sm:$0xff] %vm622, %v602
        %638 = vst.msk [vmem:[#allocation2 + $0xb4] sm:$0xff] %vm622, %v603
        %v639 = vld [vmem:[%s506] sm:$0xf]
        %v640 = vld [vmem:[%s506 + $0x4] sm:$0xf]
        %v641 = vld [vmem:[%s506 + $0x8] sm:$0x1]
        %v642 = vld [vmem:[%s506 + $0x18] sm:$0xf]
        %v643 = vld [vmem:[%s506 + $0x1c] sm:$0xf]
        %v644 = vld [vmem:[%s506 + $0x20] sm:$0x1]
        %v645 = vld [vmem:[%s506 + $0x30] sm:$0xf]
        %v646 = vld [vmem:[%s506 + $0x34] sm:$0xf]
        %v647 = vld [vmem:[%s506 + $0x38] sm:$0x1]
        %v648 = vld [vmem:[%s506 + $0x48] sm:$0xf]
        %v649 = vld [vmem:[%s506 + $0x4c] sm:$0xf]
        %v650 = vld [vmem:[%s506 + $0x50] sm:$0x1]
        %v651 = vld [vmem:[%s506 + $0x60] sm:$0xf]
        %v652 = vld [vmem:[%s506 + $0x64] sm:$0xf]
        %v653 = vld [vmem:[%s506 + $0x68] sm:$0x1]
        %v654 = vld [vmem:[%s506 + $0x78] sm:$0xf]
        %v655 = vld [vmem:[%s506 + $0x7c] sm:$0xf]
        %v656 = vld [vmem:[%s506 + $0x80] sm:$0x1]
        %v657 = vld [vmem:[%s506 + $0x90] sm:$0xf]
        %v658 = vld [vmem:[%s506 + $0x94] sm:$0xf]
        %v659 = vld [vmem:[%s506 + $0x98] sm:$0x1]
        %v660 = vld [vmem:[%s506 + $0xa8] sm:$0xf]
        %v661 = vld [vmem:[%s506 + $0xac] sm:$0xf]
        %v662 = vld [vmem:[%s506 + $0xb0] sm:$0x1]
        %v664 = vshrl.u32 %v639, 16
        %v666 = vrot.slane %v664, 4
        %v667 = vshll.u32 %v639, 16
        %v669 = vrot.slane %v667, 5
        %v670 = vor.u32 %v666, %v669
        %v671 = vrot.slane %v670, 4
        %v673 = vshll.u32 %v640, 16
        %v675 = vrot.slane %v673, 5
        %v676 = vsel %vm246, %v671, %v675
        %v677 = vshrl.u32 %v640, 16
        %v679 = vrot.slane %v677, 4
        %v680 = vor.u32 %v679, %v675
        %v681 = vrot.slane %v680, 4
        %v683 = vshll.u32 %v641, 16
        %v685 = vrot.slane %v683, 5
        %v686 = vsel %vm246, %v681, %v685
        %v688 = vshrl.u32 %v642, 16
        %v690 = vrot.slane %v688, 4
        %v691 = vshll.u32 %v642, 16
        %v693 = vrot.slane %v691, 5
        %v694 = vor.u32 %v690, %v693
        %v695 = vrot.slane %v694, 4
        %v697 = vshll.u32 %v643, 16
        %v699 = vrot.slane %v697, 5
        %v700 = vsel %vm246, %v695, %v699
        %v701 = vshrl.u32 %v643, 16
        %v703 = vrot.slane %v701, 4
        %v704 = vor.u32 %v703, %v699
        %v705 = vrot.slane %v704, 4
        %v707 = vshll.u32 %v644, 16
        %v709 = vrot.slane %v707, 5
        %v710 = vsel %vm246, %v705, %v709
        %v712 = vshrl.u32 %v645, 16
        %v714 = vrot.slane %v712, 4
        %v715 = vshll.u32 %v645, 16
        %v717 = vrot.slane %v715, 5
        %v718 = vor.u32 %v714, %v717
        %v719 = vrot.slane %v718, 4
        %v721 = vshll.u32 %v646, 16
        %v723 = vrot.slane %v721, 5
        %v724 = vsel %vm246, %v719, %v723
        %v725 = vshrl.u32 %v646, 16
        %v727 = vrot.slane %v725, 4
        %v728 = vor.u32 %v727, %v723
        %v729 = vrot.slane %v728, 4
        %v731 = vshll.u32 %v647, 16
        %v733 = vrot.slane %v731, 5
        %v734 = vsel %vm246, %v729, %v733
        %v736 = vshrl.u32 %v648, 16
        %v738 = vrot.slane %v736, 4
        %v739 = vshll.u32 %v648, 16
        %v741 = vrot.slane %v739, 5
        %v742 = vor.u32 %v738, %v741
        %v743 = vrot.slane %v742, 4
        %v745 = vshll.u32 %v649, 16
        %v747 = vrot.slane %v745, 5
        %v748 = vsel %vm246, %v743, %v747
        %v749 = vshrl.u32 %v649, 16
        %v751 = vrot.slane %v749, 4
        %v752 = vor.u32 %v751, %v747
        %v753 = vrot.slane %v752, 4
        %v755 = vshll.u32 %v650, 16
        %v757 = vrot.slane %v755, 5
        %v758 = vsel %vm246, %v753, %v757
        %v760 = vshrl.u32 %v651, 16
        %v762 = vrot.slane %v760, 4
        %v763 = vshll.u32 %v651, 16
        %v765 = vrot.slane %v763, 5
        %v766 = vor.u32 %v762, %v765
        %v767 = vrot.slane %v766, 4
        %v769 = vshll.u32 %v652, 16
        %v771 = vrot.slane %v769, 5
        %v772 = vsel %vm246, %v767, %v771
        %v773 = vshrl.u32 %v652, 16
        %v775 = vrot.slane %v773, 4
        %v776 = vor.u32 %v775, %v771
        %v777 = vrot.slane %v776, 4
        %v779 = vshll.u32 %v653, 16
        %v781 = vrot.slane %v779, 5
        %v782 = vsel %vm246, %v777, %v781
        %v784 = vshrl.u32 %v654, 16
        %v786 = vrot.slane %v784, 4
        %v787 = vshll.u32 %v654, 16
        %v789 = vrot.slane %v787, 5
        %v790 = vor.u32 %v786, %v789
        %v791 = vrot.slane %v790, 4
        %v793 = vshll.u32 %v655, 16
        %v795 = vrot.slane %v793, 5
        %v796 = vsel %vm246, %v791, %v795
        %v797 = vshrl.u32 %v655, 16
        %v799 = vrot.slane %v797, 4
        %v800 = vor.u32 %v799, %v795
        %v801 = vrot.slane %v800, 4
        %v803 = vshll.u32 %v656, 16
        %v805 = vrot.slane %v803, 5
        %v806 = vsel %vm246, %v801, %v805
        %v808 = vshrl.u32 %v657, 16
        %v810 = vrot.slane %v808, 4
        %v811 = vshll.u32 %v657, 16
        %v813 = vrot.slane %v811, 5
        %v814 = vor.u32 %v810, %v813
        %v815 = vrot.slane %v814, 4
        %v817 = vshll.u32 %v658, 16
        %v819 = vrot.slane %v817, 5
        %v820 = vsel %vm246, %v815, %v819
        %v821 = vshrl.u32 %v658, 16
        %v823 = vrot.slane %v821, 4
        %v824 = vor.u32 %v823, %v819
        %v825 = vrot.slane %v824, 4
        %v827 = vshll.u32 %v659, 16
        %v829 = vrot.slane %v827, 5
        %v830 = vsel %vm246, %v825, %v829
        %v832 = vshrl.u32 %v660, 16
        %v834 = vrot.slane %v832, 4
        %v835 = vshll.u32 %v660, 16
        %v837 = vrot.slane %v835, 5
        %v838 = vor.u32 %v834, %v837
        %v839 = vrot.slane %v838, 4
        %v841 = vshll.u32 %v661, 16
        %v843 = vrot.slane %v841, 5
        %v844 = vsel %vm246, %v839, %v843
        %v845 = vshrl.u32 %v661, 16
        %v847 = vrot.slane %v845, 4
        %v848 = vor.u32 %v847, %v843
        %v849 = vrot.slane %v848, 4
        %v851 = vshll.u32 %v662, 16
        %v853 = vrot.slane %v851, 5
        %v854 = vsel %vm246, %v849, %v853
        %855 = vrot.lane.b32.xlu0 %v676, 32
        %v856 = vpop.permute.xlu0 %855
        %857 = vrot.lane.b32.xlu0 %v686, 32
        %v858 = vpop.permute.xlu0 %857
        %859 = vrot.lane.b32.xlu0 %v700, 32
        %v860 = vpop.permute.xlu0 %859
        %861 = vrot.lane.b32.xlu0 %v710, 32
        %v862 = vpop.permute.xlu0 %861
        %863 = vrot.lane.b32.xlu0 %v724, 32
        %v864 = vpop.permute.xlu0 %863
        %865 = vrot.lane.b32.xlu0 %v734, 32
        %v866 = vpop.permute.xlu0 %865
        %867 = vrot.lane.b32.xlu0 %v748, 32
        %v868 = vpop.permute.xlu0 %867
        %869 = vrot.lane.b32.xlu0 %v758, 32
        %v870 = vpop.permute.xlu0 %869
        %871 = vrot.lane.b32.xlu0 %v772, 32
        %v872 = vpop.permute.xlu0 %871
        %873 = vrot.lane.b32.xlu0 %v782, 32
        %v874 = vpop.permute.xlu0 %873
        %875 = vrot.lane.b32.xlu0 %v796, 32
        %v876 = vpop.permute.xlu0 %875
        %877 = vrot.lane.b32.xlu0 %v806, 32
        %v878 = vpop.permute.xlu0 %877
        %879 = vrot.lane.b32.xlu0 %v820, 32
        %v880 = vpop.permute.xlu0 %879
        %881 = vrot.lane.b32.xlu0 %v830, 32
        %v882 = vpop.permute.xlu0 %881
        %883 = vrot.lane.b32.xlu0 %v844, 32
        %v884 = vpop.permute.xlu0 %883
        %885 = vrot.lane.b32.xlu0 %v854, 32
        %v886 = vpop.permute.xlu0 %885
        %vm903 = vcmask 519424
        %904 = vst.msk [vmem:[#allocation2 + $0x4] sm:$0xf] %vm903, %v856
        %905 = vst.msk [vmem:[#allocation2 + $0x10] sm:$0xf] %vm903, %v858
        %906 = vst.msk [vmem:[#allocation2 + $0x1c] sm:$0xf] %vm903, %v860
        %907 = vst.msk [vmem:[#allocation2 + $0x28] sm:$0xf] %vm903, %v862
        %908 = vst.msk [vmem:[#allocation2 + $0x34] sm:$0xf] %vm903, %v864
        %909 = vst.msk [vmem:[#allocation2 + $0x40] sm:$0xf] %vm903, %v866
        %910 = vst.msk [vmem:[#allocation2 + $0x4c] sm:$0xf] %vm903, %v868
        %911 = vst.msk [vmem:[#allocation2 + $0x58] sm:$0xf] %vm903, %v870
        %912 = vst.msk [vmem:[#allocation2 + $0x64] sm:$0xf] %vm903, %v872
        %913 = vst.msk [vmem:[#allocation2 + $0x70] sm:$0xf] %vm903, %v874
        %914 = vst.msk [vmem:[#allocation2 + $0x7c] sm:$0xf] %vm903, %v876
        %915 = vst.msk [vmem:[#allocation2 + $0x88] sm:$0xf] %vm903, %v878
        %916 = vst.msk [vmem:[#allocation2 + $0x94] sm:$0xf] %vm903, %v880
        %917 = vst.msk [vmem:[#allocation2 + $0xa0] sm:$0xf] %vm903, %v882
        %918 = vst.msk [vmem:[#allocation2 + $0xac] sm:$0xf] %vm903, %v884
        %919 = vst.msk [vmem:[#allocation2 + $0xb8] sm:$0xf] %vm903, %v886
        %s920 = sadd.s32 %s183, 1
        %s921 = smul.u32 %s920, 6
        %s922 = smul.addr %s921, 4
        %s923 = scalar_lea.vmem %s182, %s922
        %v924 = vld [vmem:[%s923] sm:$0xf]
        %v925 = vld [vmem:[%s923 + $0x4] sm:$0xf]
        %v926 = vld [vmem:[%s923 + $0x18] sm:$0xf]
        %v927 = vld [vmem:[%s923 + $0x1c] sm:$0xf]
        %v928 = vld [vmem:[%s923 + $0x30] sm:$0xf]
        %v929 = vld [vmem:[%s923 + $0x34] sm:$0xf]
        %v930 = vld [vmem:[%s923 + $0x48] sm:$0xf]
        %v931 = vld [vmem:[%s923 + $0x4c] sm:$0xf]
        %v932 = vld [vmem:[%s923 + $0x60] sm:$0xf]
        %v933 = vld [vmem:[%s923 + $0x64] sm:$0xf]
        %v934 = vld [vmem:[%s923 + $0x78] sm:$0xf]
        %v935 = vld [vmem:[%s923 + $0x7c] sm:$0xf]
        %v936 = vld [vmem:[%s923 + $0x90] sm:$0xf]
        %v937 = vld [vmem:[%s923 + $0x94] sm:$0xf]
        %v938 = vld [vmem:[%s923 + $0xa8] sm:$0xf]
        %v939 = vld [vmem:[%s923 + $0xac] sm:$0xf]
        %956 = vrot.lane.b32.xlu0 %v924, 64
        %v957 = vpop.permute.xlu0 %956
        %958 = vrot.lane.b32.xlu0 %v925, 64
        %v959 = vpop.permute.xlu0 %958
        %960 = vrot.lane.b32.xlu0 %v926, 64
        %v961 = vpop.permute.xlu0 %960
        %962 = vrot.lane.b32.xlu0 %v927, 64
        %v963 = vpop.permute.xlu0 %962
        %964 = vrot.lane.b32.xlu0 %v928, 64
        %v965 = vpop.permute.xlu0 %964
        %966 = vrot.lane.b32.xlu0 %v929, 64
        %v967 = vpop.permute.xlu0 %966
        %968 = vrot.lane.b32.xlu0 %v930, 64
        %v969 = vpop.permute.xlu0 %968
        %970 = vrot.lane.b32.xlu0 %v931, 64
        %v971 = vpop.permute.xlu0 %970
        %972 = vrot.lane.b32.xlu0 %v932, 64
        %v973 = vpop.permute.xlu0 %972
        %974 = vrot.lane.b32.xlu0 %v933, 64
        %v975 = vpop.permute.xlu0 %974
        %976 = vrot.lane.b32.xlu0 %v934, 64
        %v977 = vpop.permute.xlu0 %976
        %978 = vrot.lane.b32.xlu0 %v935, 64
        %v979 = vpop.permute.xlu0 %978
        %980 = vrot.lane.b32.xlu0 %v936, 64
        %v981 = vpop.permute.xlu0 %980
        %982 = vrot.lane.b32.xlu0 %v937, 64
        %v983 = vpop.permute.xlu0 %982
        %984 = vrot.lane.b32.xlu0 %v938, 64
        %v985 = vpop.permute.xlu0 %984
        %986 = vrot.lane.b32.xlu0 %v939, 64
        %v987 = vpop.permute.xlu0 %986
        %vm1004 = vcmask 1043968
        %1005 = vst.msk [vmem:[#allocation2 + $0x4] sm:$0xf] %vm1004, %v957
        %1006 = vst.msk [vmem:[#allocation2 + $0x10] sm:$0xf] %vm1004, %v959
        %1007 = vst.msk [vmem:[#allocation2 + $0x1c] sm:$0xf] %vm1004, %v961
        %1008 = vst.msk [vmem:[#allocation2 + $0x28] sm:$0xf] %vm1004, %v963
        %1009 = vst.msk [vmem:[#allocation2 + $0x34] sm:$0xf] %vm1004, %v965
        %1010 = vst.msk [vmem:[#allocation2 + $0x40] sm:$0xf] %vm1004, %v967
        %1011 = vst.msk [vmem:[#allocation2 + $0x4c] sm:$0xf] %vm1004, %v969
        %1012 = vst.msk [vmem:[#allocation2 + $0x58] sm:$0xf] %vm1004, %v971
        %1013 = vst.msk [vmem:[#allocation2 + $0x64] sm:$0xf] %vm1004, %v973
        %1014 = vst.msk [vmem:[#allocation2 + $0x70] sm:$0xf] %vm1004, %v975
        %1015 = vst.msk [vmem:[#allocation2 + $0x7c] sm:$0xf] %vm1004, %v977
        %1016 = vst.msk [vmem:[#allocation2 + $0x88] sm:$0xf] %vm1004, %v979
        %1017 = vst.msk [vmem:[#allocation2 + $0x94] sm:$0xf] %vm1004, %v981
        %1018 = vst.msk [vmem:[#allocation2 + $0xa0] sm:$0xf] %vm1004, %v983
        %1019 = vst.msk [vmem:[#allocation2 + $0xac] sm:$0xf] %vm1004, %v985
        %1020 = vst.msk [vmem:[#allocation2 + $0xb8] sm:$0xf] %vm1004, %v987
        %v1021 = vld [vmem:[%s923] sm:$0xf]
        %v1022 = vld [vmem:[%s923 + $0x4] sm:$0xf]
        %v1023 = vld [vmem:[%s923 + $0x8] sm:$0x1]
        %v1024 = vld [vmem:[%s923 + $0x18] sm:$0xf]
        %v1025 = vld [vmem:[%s923 + $0x1c] sm:$0xf]
        %v1026 = vld [vmem:[%s923 + $0x20] sm:$0x1]
        %v1027 = vld [vmem:[%s923 + $0x30] sm:$0xf]
        %v1028 = vld [vmem:[%s923 + $0x34] sm:$0xf]
        %v1029 = vld [vmem:[%s923 + $0x38] sm:$0x1]
        %v1030 = vld [vmem:[%s923 + $0x48] sm:$0xf]
        %v1031 = vld [vmem:[%s923 + $0x4c] sm:$0xf]
        %v1032 = vld [vmem:[%s923 + $0x50] sm:$0x1]
        %v1033 = vld [vmem:[%s923 + $0x60] sm:$0xf]
        %v1034 = vld [vmem:[%s923 + $0x64] sm:$0xf]
        %v1035 = vld [vmem:[%s923 + $0x68] sm:$0x1]
        %v1036 = vld [vmem:[%s923 + $0x78] sm:$0xf]
        %v1037 = vld [vmem:[%s923 + $0x7c] sm:$0xf]
        %v1038 = vld [vmem:[%s923 + $0x80] sm:$0x1]
        %v1039 = vld [vmem:[%s923 + $0x90] sm:$0xf]
        %v1040 = vld [vmem:[%s923 + $0x94] sm:$0xf]
        %v1041 = vld [vmem:[%s923 + $0x98] sm:$0x1]
        %v1042 = vld [vmem:[%s923 + $0xa8] sm:$0xf]
        %v1043 = vld [vmem:[%s923 + $0xac] sm:$0xf]
        %v1044 = vld [vmem:[%s923 + $0xb0] sm:$0x1]
        %v1046 = vshrl.u32 %v1021, 16
        %v1048 = vrot.slane %v1046, 4
        %v1049 = vshll.u32 %v1021, 16
        %v1051 = vrot.slane %v1049, 5
        %v1052 = vor.u32 %v1048, %v1051
        %v1053 = vrot.slane %v1052, 4
        %v1055 = vshll.u32 %v1022, 16
        %v1057 = vrot.slane %v1055, 5
        %v1058 = vsel %vm246, %v1053, %v1057
        %v1059 = vshrl.u32 %v1022, 16
        %v1061 = vrot.slane %v1059, 4
        %v1062 = vor.u32 %v1061, %v1057
        %v1063 = vrot.slane %v1062, 4
        %v1065 = vshll.u32 %v1023, 16
        %v1067 = vrot.slane %v1065, 5
        %v1068 = vsel %vm246, %v1063, %v1067
        %v1070 = vshrl.u32 %v1024, 16
        %v1072 = vrot.slane %v1070, 4
        %v1073 = vshll.u32 %v1024, 16
        %v1075 = vrot.slane %v1073, 5
        %v1076 = vor.u32 %v1072, %v1075
        %v1077 = vrot.slane %v1076, 4
        %v1079 = vshll.u32 %v1025, 16
        %v1081 = vrot.slane %v1079, 5
        %v1082 = vsel %vm246, %v1077, %v1081
        %v1083 = vshrl.u32 %v1025, 16
        %v1085 = vrot.slane %v1083, 4
        %v1086 = vor.u32 %v1085, %v1081
        %v1087 = vrot.slane %v1086, 4
        %v1089 = vshll.u32 %v1026, 16
        %v1091 = vrot.slane %v1089, 5
        %v1092 = vsel %vm246, %v1087, %v1091
        %v1094 = vshrl.u32 %v1027, 16
        %v1096 = vrot.slane %v1094, 4
        %v1097 = vshll.u32 %v1027, 16
        %v1099 = vrot.slane %v1097, 5
        %v1100 = vor.u32 %v1096, %v1099
        %v1101 = vrot.slane %v1100, 4
        %v1103 = vshll.u32 %v1028, 16
        %v1105 = vrot.slane %v1103, 5
        %v1106 = vsel %vm246, %v1101, %v1105
        %v1107 = vshrl.u32 %v1028, 16
        %v1109 = vrot.slane %v1107, 4
        %v1110 = vor.u32 %v1109, %v1105
        %v1111 = vrot.slane %v1110, 4
        %v1113 = vshll.u32 %v1029, 16
        %v1115 = vrot.slane %v1113, 5
        %v1116 = vsel %vm246, %v1111, %v1115
        %v1118 = vshrl.u32 %v1030, 16
        %v1120 = vrot.slane %v1118, 4
        %v1121 = vshll.u32 %v1030, 16
        %v1123 = vrot.slane %v1121, 5
        %v1124 = vor.u32 %v1120, %v1123
        %v1125 = vrot.slane %v1124, 4
        %v1127 = vshll.u32 %v1031, 16
        %v1129 = vrot.slane %v1127, 5
        %v1130 = vsel %vm246, %v1125, %v1129
        %v1131 = vshrl.u32 %v1031, 16
        %v1133 = vrot.slane %v1131, 4
        %v1134 = vor.u32 %v1133, %v1129
        %v1135 = vrot.slane %v1134, 4
        %v1137 = vshll.u32 %v1032, 16
        %v1139 = vrot.slane %v1137, 5
        %v1140 = vsel %vm246, %v1135, %v1139
        %v1142 = vshrl.u32 %v1033, 16
        %v1144 = vrot.slane %v1142, 4
        %v1145 = vshll.u32 %v1033, 16
        %v1147 = vrot.slane %v1145, 5
        %v1148 = vor.u32 %v1144, %v1147
        %v1149 = vrot.slane %v1148, 4
        %v1151 = vshll.u32 %v1034, 16
        %v1153 = vrot.slane %v1151, 5
        %v1154 = vsel %vm246, %v1149, %v1153
        %v1155 = vshrl.u32 %v1034, 16
        %v1157 = vrot.slane %v1155, 4
        %v1158 = vor.u32 %v1157, %v1153
        %v1159 = vrot.slane %v1158, 4
        %v1161 = vshll.u32 %v1035, 16
        %v1163 = vrot.slane %v1161, 5
        %v1164 = vsel %vm246, %v1159, %v1163
        %v1166 = vshrl.u32 %v1036, 16
        %v1168 = vrot.slane %v1166, 4
        %v1169 = vshll.u32 %v1036, 16
        %v1171 = vrot.slane %v1169, 5
        %v1172 = vor.u32 %v1168, %v1171
        %v1173 = vrot.slane %v1172, 4
        %v1175 = vshll.u32 %v1037, 16
        %v1177 = vrot.slane %v1175, 5
        %v1178 = vsel %vm246, %v1173, %v1177
        %v1179 = vshrl.u32 %v1037, 16
        %v1181 = vrot.slane %v1179, 4
        %v1182 = vor.u32 %v1181, %v1177
        %v1183 = vrot.slane %v1182, 4
        %v1185 = vshll.u32 %v1038, 16
        %v1187 = vrot.slane %v1185, 5
        %v1188 = vsel %vm246, %v1183, %v1187
        %v1190 = vshrl.u32 %v1039, 16
        %v1192 = vrot.slane %v1190, 4
        %v1193 = vshll.u32 %v1039, 16
        %v1195 = vrot.slane %v1193, 5
        %v1196 = vor.u32 %v1192, %v1195
        %v1197 = vrot.slane %v1196, 4
        %v1199 = vshll.u32 %v1040, 16
        %v1201 = vrot.slane %v1199, 5
        %v1202 = vsel %vm246, %v1197, %v1201
        %v1203 = vshrl.u32 %v1040, 16
        %v1205 = vrot.slane %v1203, 4
        %v1206 = vor.u32 %v1205, %v1201
        %v1207 = vrot.slane %v1206, 4
        %v1209 = vshll.u32 %v1041, 16
        %v1211 = vrot.slane %v1209, 5
        %v1212 = vsel %vm246, %v1207, %v1211
        %v1214 = vshrl.u32 %v1042, 16
        %v1216 = vrot.slane %v1214, 4
        %v1217 = vshll.u32 %v1042, 16
        %v1219 = vrot.slane %v1217, 5
        %v1220 = vor.u32 %v1216, %v1219
        %v1221 = vrot.slane %v1220, 4
        %v1223 = vshll.u32 %v1043, 16
        %v1225 = vrot.slane %v1223, 5
        %v1226 = vsel %vm246, %v1221, %v1225
        %v1227 = vshrl.u32 %v1043, 16
        %v1229 = vrot.slane %v1227, 4
        %v1230 = vor.u32 %v1229, %v1225
        %v1231 = vrot.slane %v1230, 4
        %v1233 = vshll.u32 %v1044, 16
        %v1235 = vrot.slane %v1233, 5
        %v1236 = vsel %vm246, %v1231, %v1235
        %vm1253 = vcmask 257024
        %1254 = vst.msk [vmem:[#allocation2 + $0x8] sm:$0xf] %vm1253, %v1058
        %1255 = vst.msk [vmem:[#allocation2 + $0x14] sm:$0xf] %vm1253, %v1068
        %1256 = vst.msk [vmem:[#allocation2 + $0x20] sm:$0xf] %vm1253, %v1082
        %1257 = vst.msk [vmem:[#allocation2 + $0x2c] sm:$0xf] %vm1253, %v1092
        %1258 = vst.msk [vmem:[#allocation2 + $0x38] sm:$0xf] %vm1253, %v1106
        %1259 = vst.msk [vmem:[#allocation2 + $0x44] sm:$0xf] %vm1253, %v1116
        %1260 = vst.msk [vmem:[#allocation2 + $0x50] sm:$0xf] %vm1253, %v1130
        %1261 = vst.msk [vmem:[#allocation2 + $0x5c] sm:$0xf] %vm1253, %v1140
        %1262 = vst.msk [vmem:[#allocation2 + $0x68] sm:$0xf] %vm1253, %v1154
        %1263 = vst.msk [vmem:[#allocation2 + $0x74] sm:$0xf] %vm1253, %v1164
        %1264 = vst.msk [vmem:[#allocation2 + $0x80] sm:$0xf] %vm1253, %v1178
        %1265 = vst.msk [vmem:[#allocation2 + $0x8c] sm:$0xf] %vm1253, %v1188
        %1266 = vst.msk [vmem:[#allocation2 + $0x98] sm:$0xf] %vm1253, %v1202
        %1267 = vst.msk [vmem:[#allocation2 + $0xa4] sm:$0xf] %vm1253, %v1212
        %1268 = vst.msk [vmem:[#allocation2 + $0xb0] sm:$0xf] %vm1253, %v1226
        %1269 = vst.msk [vmem:[#allocation2 + $0xbc] sm:$0xf] %vm1253, %v1236
        %v1270 = vld [vmem:[#allocation2] sm:$0xff]
        %v1271 = vld [vmem:[#allocation2 + $0x8] sm:$0xf]
        %v1272 = vld [vmem:[#allocation2 + $0xc] sm:$0xff]
        %v1273 = vld [vmem:[#allocation2 + $0x14] sm:$0xf]
        %v1274 = vld [vmem:[#allocation2 + $0x18] sm:$0xff]
        %v1275 = vld [vmem:[#allocation2 + $0x20] sm:$0xf]
        %v1276 = vld [vmem:[#allocation2 + $0x24] sm:$0xff]
        %v1277 = vld [vmem:[#allocation2 + $0x2c] sm:$0xf]
        %v1278 = vld [vmem:[#allocation2 + $0x30] sm:$0xff]
        %v1279 = vld [vmem:[#allocation2 + $0x38] sm:$0xf]
        %v1280 = vld [vmem:[#allocation2 + $0x3c] sm:$0xff]
        %v1281 = vld [vmem:[#allocation2 + $0x44] sm:$0xf]
        %v1282 = vld [vmem:[#allocation2 + $0x48] sm:$0xff]
        %v1283 = vld [vmem:[#allocation2 + $0x50] sm:$0xf]
        %v1284 = vld [vmem:[#allocation2 + $0x54] sm:$0xff]
        %v1285 = vld [vmem:[#allocation2 + $0x5c] sm:$0xf]
        %v1286 = vld [vmem:[#allocation2 + $0x60] sm:$0xff]
        %v1287 = vld [vmem:[#allocation2 + $0x68] sm:$0xf]
        %v1288 = vld [vmem:[#allocation2 + $0x6c] sm:$0xff]
        %v1289 = vld [vmem:[#allocation2 + $0x74] sm:$0xf]
        %v1290 = vld [vmem:[#allocation2 + $0x78] sm:$0xff]
        %v1291 = vld [vmem:[#allocation2 + $0x80] sm:$0xf]
        %v1292 = vld [vmem:[#allocation2 + $0x84] sm:$0xff]
        %v1293 = vld [vmem:[#allocation2 + $0x8c] sm:$0xf]
        %v1294 = vld [vmem:[#allocation2 + $0x90] sm:$0xff]
        %v1295 = vld [vmem:[#allocation2 + $0x98] sm:$0xf]
        %v1296 = vld [vmem:[#allocation2 + $0x9c] sm:$0xff]
        %v1297 = vld [vmem:[#allocation2 + $0xa4] sm:$0xf]
        %v1298 = vld [vmem:[#allocation2 + $0xa8] sm:$0xff]
        %v1299 = vld [vmem:[#allocation2 + $0xb0] sm:$0xf]
        %v1300 = vld [vmem:[#allocation2 + $0xb4] sm:$0xff]
        %v1301 = vld [vmem:[#allocation2 + $0xbc] sm:$0xf]
        %v1302 = vld [vmem:[%s1] sm:$0xff]
        %v1303 = vld [vmem:[%s1 + $0x8] sm:$0xf]
        %v1304 = vld [vmem:[%s1 + $0xc] sm:$0xff]
        %v1305 = vld [vmem:[%s1 + $0x14] sm:$0xf]
        %v1306 = vld [vmem:[%s1 + $0x18] sm:$0xff]
        %v1307 = vld [vmem:[%s1 + $0x20] sm:$0xf]
        %v1308 = vld [vmem:[%s1 + $0x24] sm:$0xff]
        %v1309 = vld [vmem:[%s1 + $0x2c] sm:$0xf]
        %v1310 = vld [vmem:[%s2] sm:$0xff]
        %v1311 = vld [vmem:[%s2 + $0x8] sm:$0xff]
        %v1312 = vld [vmem:[%s2 + $0x10] sm:$0xff]
        %v1313 = vld [vmem:[%s2 + $0x18] sm:$0xff]
        %1315 = vset.pattern.permute.xlu0 0
        %1316 = vperm.xlu0 %1315, %v1310
        %v1317 = vpop.permute.xlu0 %1316
        %1320 = vset.pattern.permute.xlu0 0
        %1321 = vperm.xlu0 %1320, %v1311
        %v1322 = vpop.permute.xlu0 %1321
        %1325 = vset.pattern.permute.xlu0 0
        %1326 = vperm.xlu0 %1325, %v1312
        %v1327 = vpop.permute.xlu0 %1326
        %1330 = vset.pattern.permute.xlu0 0
        %1331 = vperm.xlu0 %1330, %v1313
        %v1332 = vpop.permute.xlu0 %1331
        %v1342 = vunpack.c.l.b16 %v1302
        %v1343 = vunpack.c.h.b16 %v1302
        %v1344 = vunpack.c.l.b16 %v1303
        %v1345 = vunpack.c.l.b16 %v1304
        %v1346 = vunpack.c.h.b16 %v1304
        %v1347 = vunpack.c.l.b16 %v1305
        %v1348 = vunpack.c.l.b16 %v1306
        %v1349 = vunpack.c.h.b16 %v1306
        %v1350 = vunpack.c.l.b16 %v1307
        %v1351 = vunpack.c.l.b16 %v1308
        %v1352 = vunpack.c.h.b16 %v1308
        %v1353 = vunpack.c.l.b16 %v1309
        %v1354 = vpack.c.b16 %v1345, %v1342
        %v1355 = vpack.c.b16 %v1346, %v1343
        %v1356 = vpack.c.b16 %v1347, %v1344
        %v1357 = vpack.c.b16 %v1351, %v1348
        %v1358 = vpack.c.b16 %v1352, %v1349
        %v1359 = vpack.c.b16 %v1353, %v1350
        %v1396 = vunpack.c.l.b16 %v1270
        %v1397 = vunpack.c.h.b16 %v1270
        %v1398 = vunpack.c.l.b16 %v1271
        %v1399 = vunpack.c.l.b16 %v1272
        %v1400 = vunpack.c.h.b16 %v1272
        %v1401 = vunpack.c.l.b16 %v1273
        %v1402 = vunpack.c.l.b16 %v1274
        %v1403 = vunpack.c.h.b16 %v1274
        %v1404 = vunpack.c.l.b16 %v1275
        %v1405 = vunpack.c.l.b16 %v1276
        %v1406 = vunpack.c.h.b16 %v1276
        %v1407 = vunpack.c.l.b16 %v1277
        %v1408 = vunpack.c.l.b16 %v1278
        %v1409 = vunpack.c.h.b16 %v1278
        %v1410 = vunpack.c.l.b16 %v1279
        %v1411 = vunpack.c.l.b16 %v1280
        %v1412 = vunpack.c.h.b16 %v1280
        %v1413 = vunpack.c.l.b16 %v1281
        %v1414 = vunpack.c.l.b16 %v1282
        %v1415 = vunpack.c.h.b16 %v1282
        %v1416 = vunpack.c.l.b16 %v1283
        %v1417 = vunpack.c.l.b16 %v1284
        %v1418 = vunpack.c.h.b16 %v1284
        %v1419 = vunpack.c.l.b16 %v1285
        %v1420 = vunpack.c.l.b16 %v1286
        %v1421 = vunpack.c.h.b16 %v1286
        %v1422 = vunpack.c.l.b16 %v1287
        %v1423 = vunpack.c.l.b16 %v1288
        %v1424 = vunpack.c.h.b16 %v1288
        %v1425 = vunpack.c.l.b16 %v1289
        %v1426 = vunpack.c.l.b16 %v1290
        %v1427 = vunpack.c.h.b16 %v1290
        %v1428 = vunpack.c.l.b16 %v1291
        %v1429 = vunpack.c.l.b16 %v1292
        %v1430 = vunpack.c.h.b16 %v1292
        %v1431 = vunpack.c.l.b16 %v1293
        %v1432 = vunpack.c.l.b16 %v1294
        %v1433 = vunpack.c.h.b16 %v1294
        %v1434 = vunpack.c.l.b16 %v1295
        %v1435 = vunpack.c.l.b16 %v1296
        %v1436 = vunpack.c.h.b16 %v1296
        %v1437 = vunpack.c.l.b16 %v1297
        %v1438 = vunpack.c.l.b16 %v1298
        %v1439 = vunpack.c.h.b16 %v1298
        %v1440 = vunpack.c.l.b16 %v1299
        %v1441 = vunpack.c.l.b16 %v1300
        %v1442 = vunpack.c.h.b16 %v1300
        %v1443 = vunpack.c.l.b16 %v1301
        %v1444 = vpack.c.b16 %v1399, %v1396
        %v1445 = vpack.c.b16 %v1400, %v1397
        %v1446 = vpack.c.b16 %v1401, %v1398
        %v1447 = vpack.c.b16 %v1405, %v1402
        %v1448 = vpack.c.b16 %v1406, %v1403
        %v1449 = vpack.c.b16 %v1407, %v1404
        %v1450 = vpack.c.b16 %v1411, %v1408
        %v1451 = vpack.c.b16 %v1412, %v1409
        %v1452 = vpack.c.b16 %v1413, %v1410
        %v1453 = vpack.c.b16 %v1417, %v1414
        %v1454 = vpack.c.b16 %v1418, %v1415
        %v1455 = vpack.c.b16 %v1419, %v1416
        %v1456 = vpack.c.b16 %v1423, %v1420
        %v1457 = vpack.c.b16 %v1424, %v1421
        %v1458 = vpack.c.b16 %v1425, %v1422
        %v1459 = vpack.c.b16 %v1429, %v1426
        %v1460 = vpack.c.b16 %v1430, %v1427
        %v1461 = vpack.c.b16 %v1431, %v1428
        %v1462 = vpack.c.b16 %v1435, %v1432
        %v1463 = vpack.c.b16 %v1436, %v1433
        %v1464 = vpack.c.b16 %v1437, %v1434
        %v1465 = vpack.c.b16 %v1441, %v1438
        %v1466 = vpack.c.b16 %v1442, %v1439
        %v1467 = vpack.c.b16 %v1443, %v1440
        %vm1484 = vcmask 261120
        %v1486 = vsel %vm1484, %v1356, 0
        %v1489 = vsel %vm1484, %v1359, 0
        %v1492 = vsel %vm1484, %v1446, 0
        %v1495 = vsel %vm1484, %v1449, 0
        %v1498 = vsel %vm1484, %v1452, 0
        %v1501 = vsel %vm1484, %v1455, 0
        %v1504 = vsel %vm1484, %v1458, 0
        %v1507 = vsel %vm1484, %v1461, 0
        %v1510 = vsel %vm1484, %v1464, 0
        %v1513 = vsel %vm1484, %v1467, 0
        %1515 = vmatpush.bf16.xpose.msra.mxu0 %v1465
        %1516 = vmatpush.bf16.xpose.msra.mxu0 %v1462
        %1517 = vmatpush.bf16.xpose.msra.mxu0 %v1459
        %1518 = vmatpush.bf16.xpose.msra.mxu0 %v1456
        %1519 = vmatpush.bf16.xpose.msra.mxu0 %v1453
        %1520 = vmatpush.bf16.xpose.msra.mxu0 %v1450
        %1521 = vmatpush.bf16.xpose.msra.mxu0 %v1447
        %1522 = vmatpush.bf16.xpose.msra.mxu0 %v1444
        %1523 = vmatmul.bf16.gmra.mxu0 %v1354
        %v1524 = vpop.f32.mrf.mxu0
        %v1525 = vadd.f32 %v1317, %v1524
        %v1526 = vpop.f32.mrf.mxu0
        %v1527 = vadd.f32 %v1322, %v1526
        %1528 = vmatmul.bf16.gmra.mxu0 %v1357
        %v1529 = vpop.f32.mrf.mxu0
        %v1530 = vadd.f32 %v1327, %v1529
        %v1531 = vpop.f32.mrf.mxu0
        %v1532 = vadd.f32 %v1332, %v1531
        %1533 = vdwg.mxu0
        %1534 = vmatpush.bf16.xpose.msra.mxu0 %v1466
        %1535 = vmatpush.bf16.xpose.msra.mxu0 %v1463
        %1536 = vmatpush.bf16.xpose.msra.mxu0 %v1460
        %1537 = vmatpush.bf16.xpose.msra.mxu0 %v1457
        %1538 = vmatpush.bf16.xpose.msra.mxu0 %v1454
        %1539 = vmatpush.bf16.xpose.msra.mxu0 %v1451
        %1540 = vmatpush.bf16.xpose.msra.mxu0 %v1448
        %1541 = vmatpush.bf16.xpose.msra.mxu0 %v1445
        %1542 = vmatmul.bf16.gmra.mxu0 %v1355
        %v1543 = vpop.f32.mrf.mxu0
        %v1544 = vadd.f32 %v1525, %v1543
        %v1545 = vpop.f32.mrf.mxu0
        %v1546 = vadd.f32 %v1527, %v1545
        %1547 = vmatmul.bf16.gmra.mxu0 %v1358
        %v1548 = vpop.f32.mrf.mxu0
        %v1549 = vadd.f32 %v1530, %v1548
        %v1550 = vpop.f32.mrf.mxu0
        %v1551 = vadd.f32 %v1532, %v1550
        %1552 = vdwg.mxu0
        %1553 = vmatpush.bf16.xpose.msra.mxu0 %v1513
        %1554 = vmatpush.bf16.xpose.msra.mxu0 %v1510
        %1555 = vmatpush.bf16.xpose.msra.mxu0 %v1507
        %1556 = vmatpush.bf16.xpose.msra.mxu0 %v1504
        %1557 = vmatpush.bf16.xpose.msra.mxu0 %v1501
        %1558 = vmatpush.bf16.xpose.msra.mxu0 %v1498
        %1559 = vmatpush.bf16.xpose.msra.mxu0 %v1495
        %1560 = vmatpush.bf16.xpose.msra.mxu0 %v1492
        %1561 = vmatmul.bf16.gmra.mxu0 %v1486
        %v1562 = vpop.f32.mrf.mxu0
        %v1563 = vadd.f32 %v1544, %v1562
        %v1564 = vpop.f32.mrf.mxu0
        %v1565 = vadd.f32 %v1546, %v1564
        %1566 = vmatmul.bf16.gmra.mxu0 %v1489
        %v1567 = vpop.f32.mrf.mxu0
        %v1568 = vadd.f32 %v1549, %v1567
        %v1569 = vpop.f32.mrf.mxu0
        %v1570 = vadd.f32 %v1551, %v1569
        %1571 = vdwg.mxu0
        %1572 = vst [vmem:[%s177] sm:$0xff] %v1563
        %1573 = vst [vmem:[%s177 + $0x8] sm:$0xff] %v1565
        %1574 = vst [vmem:[%s177 + $0x10] sm:$0xff] %v1568
        %1575 = vst [vmem:[%s177 + $0x18] sm:$0xff] %v1570
        %s1576 = sand.u32 %s107, 1
        %s1577 = scalar_lea.sflag [#allocation4], %s1576
        %s1578 = sand.u32 %s107, 1
        %s1579 = smul.addr %s1578, 32
        %s1580 = scalar_lea.vmem [#allocation3], %s1579
        // Predicated region
        $region33: #{tpu_custom_call.1} parent=31 // pred_check
          %p1581 = pneg %p117
        $region34: #{tpu_custom_call.1} parent=31 // pred_check_branch
          %1583 = sbr.rel (%p1581) target = $region36
        $region35: #{tpu_custom_call.1} parent=31 // pred_region
          %1585 = vsyncadd %s1577, 0
          %s1586 = smul.addr %s21, 8
          %s1587 = sadd.s32 %s22, %s1586
          %s1588 = smul.addr %s1587, 8
          %s1589 = scalar_lea.hbm %s3, %s1588
          %s1590 = sshll.u32 %s1580, 4
          %s1591 = int_to_ptr.vmem [resolvable:$true] %s1590
          %s1592 = sshll.u32 %s1589, 4
          %s1593 = int_to_ptr.hbm [resolvable:$true] %s1592
          %1598 = dma.vmem_to_hbm [thread:$0]  %s1591, 512, %s1593, %s1577, 128, 256, 8
        $region36: #{tpu_custom_call.1} parent=31 // pred_fallthru
          _
      $region32: #{tpu_custom_call.1} parent=5 // pred_fallthru
        _
      %p1599 = scmp.le.s32.totalorder 2, %s12
      // Predicated region
      $region37: #{tpu_custom_call.1} parent=5 // pred_check
        %p1600 = pneg %p1599
      $region38: #{tpu_custom_call.1} parent=5 // pred_check_branch
        %1602 = sbr.rel (%p1600) target = $region40
      $region39: #{tpu_custom_call.1} parent=5 // pred_region
        %s1603 = ssub.s32 %s12, 2
        // Predicated region
        $region41: #{tpu_custom_call.1} parent=39 // pred_check
          %p1604 = pneg %p123
        $region42: #{tpu_custom_call.1} parent=39 // pred_check_branch
          %1606 = sbr.rel (%p1604) target = $region44
        $region43: #{tpu_custom_call.1} parent=39 // pred_region
          %s1607 = sand.u32 %s108, 1
          %s1608 = scalar_lea.sflag [#allocation4], %s1607
          %s1609 = sand.u32 %s108, 1
          %s1610 = smul.addr %s1609, 32
          %s1611 = scalar_lea.vmem [#allocation3], %s1610
          %1613 = dma.done %s1608, 512
        $region44: #{tpu_custom_call.1} parent=39 // pred_fallthru
          _
      $region40: #{tpu_custom_call.1} parent=5 // pred_fallthru
        _
    $region6: #{tpu_custom_call.1} parent=1 // loop_footer
      %s16 = sadd.s32 1, %s12
    $region7: #{tpu_custom_call.1} parent=1 // loop_footer_branch
      %11 = sbr.rel target = $region3
    $region8: #{tpu_custom_call.1} parent=1 // loop_exit
      _
    %1614 = vsyncpa [#allocation4], 1
    %s1615 = scalar_lea.sflag [#allocation4], 1
    %1616 = vsyncpa %s1615, 1

</llo_original>
